<compile_context>
chip_gen: v7x
topology: tpu7x:2x2x1
jax: 0.10.0
libtpu: 0.0.40
codegen_flags: <defaults>
</compile_context>

<pallas_src>
import functools

import jax
import jax.numpy as jnp
from jax.experimental import pallas as pl
from jax.experimental.pallas import tpu as pltpu


def _macro_soft_f2_kernel(y_ref, logit_ref, cost_ref,
                          tp_acc, s_acc, *, B, TB, SUB, TL):
    b = pl.program_id(1)

    @pl.when(b == 0)
    def _init():
        tp_acc[...] = jnp.zeros_like(tp_acc)
        s_acc[...] = jnp.zeros_like(s_acc)

    # Upcast to f32 inside the kernel (callers may feed bf16 / int8 to cut HBM
    # traffic; math stays f32 on all chips).
    y = y_ref[...].astype(jnp.float32)
    y_hat = jax.nn.sigmoid(logit_ref[...].astype(jnp.float32))

    if B % TB != 0:
        # Static check: only the last batch tile can be partial -> mask the
        # garbage rows of that tile.
        row = jax.lax.broadcasted_iota(jnp.int32, (TB, TL), 0)
        valid = (b * TB + row) < B
        y = jnp.where(valid, y, 0.0)
        y_hat = jnp.where(valid, y_hat, 0.0)

    def fold(x):
        # (TB, TL) -> (SUB, TL): vreg-aligned chunked adds, VPU only (no XLU
        # cross-sublane reduce inside the hot loop).
        return x.reshape(TB // SUB, SUB, TL).sum(axis=0)

    # Only tp and (sum(y) + sum(y_hat)) are needed for the final formula.
    tp_acc[...] += fold(y * y_hat)
    s_acc[...] += fold(y + y_hat)

    @pl.when(b == pl.num_programs(1) - 1)
    def _finalize():
        tp = jnp.sum(tp_acc[...], axis=0, keepdims=True)   # (1, TL), XLU once
        s = jnp.sum(s_acc[...], axis=0, keepdims=True)     # sum(y) + sum(y_hat)
        # Original: 5*tp / (4*2*tp + fn + fp + 1e-16)
        #   with fn + fp = s - 2*tp  ->  denom = 6*tp + s + 1e-16
        denom = 6.0 * tp + s + 1e-16
        cost_ref[...] = 1.0 - (5.0 * tp) / denom            # per-label cost


def _pick_tiles(B, L, bytes_per_elem_pair):
    # Label tile: lane axis must be a multiple of 128 or the full dim.
    TL = L
    for cand in (512, 256, 128):
        if L % cand == 0:
            TL = cand
            break
    # Batch tile: 2 inputs x 2 pipeline buffers of (TB, TL) kept around ~8 MiB.
    budget = 8 * 1024 * 1024
    tb = budget // (2 * bytes_per_elem_pair * TL)
    tb = max(8, min(1024, (tb // 8) * 8))
    TB = B if tb >= B else tb
    return TB, TL


def macro_soft_f2_loss(y, logit, *, tb=None, tl=None):
    """y: (B, L) targets (any int/float dtype), logit: (B, L) logits -> scalar f32."""
    assert y.ndim == 2 and y.shape == logit.shape
    B, L = y.shape
    bytes_per_pair = y.dtype.itemsize + logit.dtype.itemsize
    TB_def, TL_def = _pick_tiles(B, L, bytes_per_pair)
    TB = TB_def if tb is None else tb
    TL = TL_def if tl is None else tl
    assert L % TL == 0, "label tile must divide N_LABELS"
    SUB = 8 if TB % 8 == 0 else TB
    n_lab = L // TL
    n_bat = pl.cdiv(B, TB)

    kernel = functools.partial(_macro_soft_f2_kernel, B=B, TB=TB, SUB=SUB, TL=TL)

    cost = pl.pallas_call(
        kernel,
        out_shape=jax.ShapeDtypeStruct((1, L), jnp.float32),
        grid_spec=pltpu.PrefetchScalarGridSpec(
            num_scalar_prefetch=0,
            grid=(n_lab, n_bat),                       # reduction (batch) axis last
            in_specs=[
                pl.BlockSpec((TB, TL), lambda j, b: (b, j)),
                pl.BlockSpec((TB, TL), lambda j, b: (b, j)),
            ],
            out_specs=pl.BlockSpec((1, TL), lambda j, b: (0, j)),
            scratch_shapes=[
                pltpu.VMEM((SUB, TL), jnp.float32),    # tp partials
                pltpu.VMEM((SUB, TL), jnp.float32),    # sum(y) + sum(y_hat) partials
            ],
        ),
        compiler_params=pltpu.CompilerParams(
            dimension_semantics=("parallel", "arbitrary")),
    )(y, logit)
    # Macro average over labels (tiny O(L) op, done in the wrapper).
    return jnp.mean(cost)


def _reference(y, logit):
    y = y.astype(jnp.float32)
    y_hat = jax.nn.sigmoid(logit.astype(jnp.float32))
    tp = (y_hat * y).sum(axis=0)
    fp = (y_hat * (1.0 - y)).sum(axis=0)
    fn = ((1.0 - y_hat) * y).sum(axis=0)
    soft_f2 = 5.0 * tp / (4.0 * 2.0 * tp + fn + fp + 1e-16)
    return (1.0 - soft_f2).mean()


if __name__ == "__main__":
    key = jax.random.PRNGKey(0)
    k1, k2, k3, k4, k5, k6 = jax.random.split(key, 6)

    # Divide is exact (outside the hot loop), so tolerance is tight f32.
    TOL = dict(atol=1e-5, rtol=1e-5)

    # Case 1: spec-shaped toy input (single block).
    B, L = 2, 8
    y = jax.random.bernoulli(k1, p=0.5, shape=(B, L)).astype(jnp.int32)
    logit = jax.random.normal(k2, (B, L), dtype=jnp.float32)
    out = macro_soft_f2_loss(y, logit)
    jax.block_until_ready(out)
    assert jnp.allclose(out, _reference(y, logit), **TOL), (out, _reference(y, logit))

    # Case 2: multi-tile batch grid with a masked partial last tile.
    B2, L2 = 50, 8
    y2 = jax.random.bernoulli(k3, p=0.3, shape=(B2, L2)).astype(jnp.int32)
    logit2 = jax.random.normal(k4, (B2, L2), dtype=jnp.float32)
    out2 = macro_soft_f2_loss(y2, logit2, tb=16)
    jax.block_until_ready(out2)
    assert jnp.allclose(out2, _reference(y2, logit2), **TOL), (out2, _reference(y2, logit2))

    # Case 3: two "parallel" label tiles x two batch tiles.
    B3, L3 = 32, 256
    y3 = jax.random.bernoulli(k5, p=0.5, shape=(B3, L3)).astype(jnp.int32)
    logit3 = jax.random.normal(k6, (B3, L3), dtype=jnp.float32)
    out3 = macro_soft_f2_loss(y3, logit3, tb=16, tl=128)
    jax.block_until_ready(out3)
    assert jnp.allclose(out3, _reference(y3, logit3), **TOL), (out3, _reference(y3, logit3))

    print("KERNEL_OK")
</pallas_src>

<mosaic_0001>
module attributes {stable_mosaic.version = 11 : i64} {
  func.func @_macro_soft_f2_kernel(%arg0: i32, %arg1: i32, %arg2: memref<2x8xi32, #tpu.memory_space<vmem>>, %arg3: memref<2x8xf32, #tpu.memory_space<vmem>>, %arg4: memref<1x8xf32, #tpu.memory_space<vmem>>, %arg5: memref<2x8xf32, #tpu.memory_space<vmem>>, %arg6: memref<2x8xf32, #tpu.memory_space<vmem>>) attributes {dimension_semantics = [#tpu.dimension_semantics<parallel>, #tpu.dimension_semantics<arbitrary>], iteration_bounds = array<i64: 1, 1>, scalar_prefetch = 0 : i64, scratch_operands = 2 : i64, tpu.core_type = #tpu.core_type<tc>, window_params = [{transform_indices = @transform_0, window_bounds = array<i64: 2, 8>}, {transform_indices = @transform_1, window_bounds = array<i64: 2, 8>}, {transform_indices = @transform_2, window_bounds = array<i64: 1, 8>}]} {
    %c0_i32 = arith.constant 0 : i32
    %0 = arith.cmpi eq, %arg1, %c0_i32 : i32
    %1 = arith.extui %0 : i1 to i32
    %c0_i32_0 = arith.constant 0 : i32
    %2 = arith.cmpi ne, %1, %c0_i32_0 : i32
    scf.if %2 {
      %cst_16 = arith.constant 0.000000e+00 : f32
      %26 = vector.broadcast %cst_16 : f32 to vector<2x8xf32>
      %c0_17 = arith.constant 0 : index
      %c0_18 = arith.constant 0 : index
      %27 = vector.load %arg5[%c0_17, %c0_18] : memref<2x8xf32, #tpu.memory_space<vmem>>, vector<2x8xf32>
      tpu.vector_store %arg5[%c0_17, %c0_18], %26 {strides = array<i32>} : memref<2x8xf32, #tpu.memory_space<vmem>>, vector<2x8xf32>,
      %cst_19 = arith.constant 0.000000e+00 : f32
      %28 = vector.broadcast %cst_19 : f32 to vector<2x8xf32>
      %c0_20 = arith.constant 0 : index
      %c0_21 = arith.constant 0 : index
      %29 = vector.load %arg6[%c0_20, %c0_21] : memref<2x8xf32, #tpu.memory_space<vmem>>, vector<2x8xf32>
      tpu.vector_store %arg6[%c0_20, %c0_21], %28 {strides = array<i32>} : memref<2x8xf32, #tpu.memory_space<vmem>>, vector<2x8xf32>,
    } else {
    }
    %c0 = arith.constant 0 : index
    %c0_1 = arith.constant 0 : index
    %3 = vector.load %arg2[%c0, %c0_1] : memref<2x8xi32, #tpu.memory_space<vmem>>, vector<2x8xi32>
    %4 = arith.sitofp %3 : vector<2x8xi32> to vector<2x8xf32>
    %c0_2 = arith.constant 0 : index
    %c0_3 = arith.constant 0 : index
    %5 = vector.load %arg3[%c0_2, %c0_3] : memref<2x8xf32, #tpu.memory_space<vmem>>, vector<2x8xf32>
    %6 = arith.negf %5 : vector<2x8xf32>
    %7 = math.exp %6 : vector<2x8xf32>
    %cst = arith.constant 1.000000e+00 : f32
    %8 = vector.broadcast %cst : f32 to vector<2x8xf32>
    %9 = arith.addf %8, %7 : vector<2x8xf32>
    %10 = arith.divf %8, %9 : vector<2x8xf32>
    %c0_4 = arith.constant 0 : index
    %c0_5 = arith.constant 0 : index
    %11 = vector.load %arg5[%c0_4, %c0_5] : memref<2x8xf32, #tpu.memory_space<vmem>>, vector<2x8xf32>
    %12 = arith.mulf %4, %10 : vector<2x8xf32>
    %13 = vector.shape_cast %12 : vector<2x8xf32> to vector<1x2x8xf32>
    %cst_6 = arith.constant dense<0.000000e+00> : vector<2x8xf32>
    %14 = vector.multi_reduction <add>, %13, %cst_6 [0] : vector<1x2x8xf32> to vector<2x8xf32>
    %15 = arith.addf %11, %14 : vector<2x8xf32>
    %c0_7 = arith.constant 0 : index
    %c0_8 = arith.constant 0 : index
    %16 = vector.load %arg5[%c0_7, %c0_8] : memref<2x8xf32, #tpu.memory_space<vmem>>, vector<2x8xf32>
    tpu.vector_store %arg5[%c0_7, %c0_8], %15 {strides = array<i32>} : memref<2x8xf32, #tpu.memory_space<vmem>>, vector<2x8xf32>,
    %c0_9 = arith.constant 0 : index
    %c0_10 = arith.constant 0 : index
    %17 = vector.load %arg6[%c0_9, %c0_10] : memref<2x8xf32, #tpu.memory_space<vmem>>, vector<2x8xf32>
    %18 = arith.addf %4, %10 : vector<2x8xf32>
    %19 = vector.shape_cast %18 : vector<2x8xf32> to vector<1x2x8xf32>
    %cst_11 = arith.constant dense<0.000000e+00> : vector<2x8xf32>
    %20 = vector.multi_reduction <add>, %19, %cst_11 [0] : vector<1x2x8xf32> to vector<2x8xf32>
    %21 = arith.addf %17, %20 : vector<2x8xf32>
    %c0_12 = arith.constant 0 : index
    %c0_13 = arith.constant 0 : index
    %22 = vector.load %arg6[%c0_12, %c0_13] : memref<2x8xf32, #tpu.memory_space<vmem>>, vector<2x8xf32>
    tpu.vector_store %arg6[%c0_12, %c0_13], %21 {strides = array<i32>} : memref<2x8xf32, #tpu.memory_space<vmem>>, vector<2x8xf32>,
    %c0_i32_14 = arith.constant 0 : i32
    %23 = arith.cmpi eq, %arg1, %c0_i32_14 : i32
    %24 = arith.extui %23 : i1 to i32
    %c0_i32_15 = arith.constant 0 : i32
    %25 = arith.cmpi ne, %24, %c0_i32_15 : i32
    scf.if %25 {
      %c0_16 = arith.constant 0 : index
      %c0_17 = arith.constant 0 : index
      %26 = vector.load %arg5[%c0_16, %c0_17] : memref<2x8xf32, #tpu.memory_space<vmem>>, vector<2x8xf32>
      %cst_18 = arith.constant dense<0.000000e+00> : vector<8xf32>
      %27 = vector.multi_reduction <add>, %26, %cst_18 [0] : vector<2x8xf32> to vector<8xf32>
      %28 = vector.shape_cast %27 : vector<8xf32> to vector<1x8xf32>
      %c0_19 = arith.constant 0 : index
      %c0_20 = arith.constant 0 : index
      %29 = vector.load %arg6[%c0_19, %c0_20] : memref<2x8xf32, #tpu.memory_space<vmem>>, vector<2x8xf32>
      %cst_21 = arith.constant dense<0.000000e+00> : vector<8xf32>
      %30 = vector.multi_reduction <add>, %29, %cst_21 [0] : vector<2x8xf32> to vector<8xf32>
      %31 = vector.shape_cast %30 : vector<8xf32> to vector<1x8xf32>
      %cst_22 = arith.constant 6.000000e+00 : f32
      %32 = vector.broadcast %cst_22 : f32 to vector<1x8xf32>
      %33 = arith.mulf %32, %28 : vector<1x8xf32>
      %34 = arith.addf %33, %31 : vector<1x8xf32>
      %cst_23 = arith.constant 1.000000e-16 : f32
      %35 = vector.broadcast %cst_23 : f32 to vector<1x8xf32>
      %36 = arith.addf %34, %35 : vector<1x8xf32>
      %cst_24 = arith.constant 5.000000e+00 : f32
      %37 = vector.broadcast %cst_24 : f32 to vector<1x8xf32>
      %38 = arith.mulf %37, %28 : vector<1x8xf32>
      %39 = arith.divf %38, %36 : vector<1x8xf32>
      %cst_25 = arith.constant 1.000000e+00 : f32
      %40 = vector.broadcast %cst_25 : f32 to vector<1x8xf32>
      %41 = arith.subf %40, %39 : vector<1x8xf32>
      %c0_26 = arith.constant 0 : index
      %c0_27 = arith.constant 0 : index
      %42 = vector.load %arg4[%c0_26, %c0_27] : memref<1x8xf32, #tpu.memory_space<vmem>>, vector<1x8xf32>
      tpu.vector_store %arg4[%c0_26, %c0_27], %41 {strides = array<i32>} : memref<1x8xf32, #tpu.memory_space<vmem>>, vector<1x8xf32>,
    } else {
    }
    return
  }
  func.func @transform_0(%arg0: i32, %arg1: i32) -> (i32, i32) {
    %c0_i32 = arith.constant 0 : i32
    return %arg1, %arg0 : i32, i32
  }
  func.func @transform_1(%arg0: i32, %arg1: i32) -> (i32, i32) {
    %c0_i32 = arith.constant 0 : i32
    return %arg1, %arg0 : i32, i32
  }
  func.func @transform_2(%arg0: i32, %arg1: i32) -> (i32, i32) {
    %c0_i32 = arith.constant 0 : i32
    %c0_i32_0 = arith.constant 0 : i32
    return %c0_i32, %arg0 : i32, i32
  }
}

</mosaic_0001>

<llo_original>
// kernel: tpu_custom_call.1
$region0: #{tpu_custom_call.1}
  #allocation0 [shape = 'u32[]', space=smem, size = 0x4, offset = 0x4, fixed_abs, tag = 'smem constant byte address 0x4 - core index']
  #allocation1 [shape = 'u32[144,128]{1,0:T(1,128)}', space=vmem, size = 0x12000, scoped, tag = 'internal scratch']
  #allocation2 [shape = 'f32[2,8]{1,0:T(2,128)}', space=vmem, size = 0x400, scoped, tag = 'scratch operand']
  #allocation3 [shape = 'f32[2,8]{1,0:T(2,128)}', space=vmem, size = 0x400, scoped, tag = 'scratch operand']
  %s0 = inlined_call_operand.hbm [shape: s32[2,8], index: 0, kind: input, shape index: {}]
  %s1 = inlined_call_operand.vmem [shape: f32[2,8], index: 1, kind: input, shape index: {}]
  %s2 = inlined_call_operand.hbm [shape: f32[1,8], index: 2, kind: output, shape index: {}]
  %s3 = sld [smem:[#allocation0]]
  $region30: #{tpu_custom_call.1} parent=0
    _
  %s5 = ssub.s32 1, %s3
  %s6 = scalar_select 0, %s5, %s3
  $region1: #{tpu_custom_call.1} parent=0
    #allocation4 [shape = 'u8[1024]{0}', space=vmem, size = 0x400, scoped, tag = 'input window, operand 0, single buffered']
    #allocation5 [shape = 's32[1]{0}', space=sflag, size = 0x4, scoped, tag = 'scoped memory for tpu_custom_call.1']
    #allocation6 [shape = 's32[1]{0}', space=sflag, size = 0x4, scoped, tag = 'scoped memory for tpu_custom_call.1']
    #allocation7 [shape = 'u8[512]{0}', space=vmem, size = 0x400, scoped, tag = 'output window, operand 0, single buffered']
    %7 = vsyncpa [#allocation5], 0
    %8 = vsyncpa [#allocation6], 0
    // Predicated region
    $region2: #{tpu_custom_call.1} parent=1 // pred_check
      _
    $region3: #{tpu_custom_call.1} parent=1 // pred_check_branch
      %10 = sbr.rel (0) target = $region5
    $region4: #{tpu_custom_call.1} parent=1 // pred_region
      %s12 = ssub.s32 32, 32
      %13 = vsyncadd [#allocation5], %s12
      %s15 = sshll.u32 [#allocation4], 4
      %s16 = int_to_ptr.vmem [resolvable:$true] %s15
      %18 = dma.hbm_to_vmem [thread:$0]  %s0, 32, %s16, [#allocation5]
    $region5: #{tpu_custom_call.1} parent=1 // pred_fallthru
      _
    // Predicated region
    $region6: #{tpu_custom_call.1} parent=1 // pred_check
      _
    $region7: #{tpu_custom_call.1} parent=1 // pred_check_branch
      %20 = sbr.rel (0) target = $region9
    $region8: #{tpu_custom_call.1} parent=1 // pred_region
      _
    $region9: #{tpu_custom_call.1} parent=1 // pred_fallthru
      _
    // Predicated region
    $region10: #{tpu_custom_call.1} parent=1 // pred_check
      _
    $region11: #{tpu_custom_call.1} parent=1 // pred_check_branch
      %22 = sbr.rel (0) target = $region13
    $region12: #{tpu_custom_call.1} parent=1 // pred_region
      %23 = dma.done [#allocation5], 32
    $region13: #{tpu_custom_call.1} parent=1 // pred_fallthru
      _
    %p24 = scmp.eq.s32.totalorder 0, 0
    // Predicated region
    $region14: #{tpu_custom_call.1} parent=1 // pred_check
      %p25 = pneg %p24
    $region15: #{tpu_custom_call.1} parent=1 // pred_check_branch
      %27 = sbr.rel (%p25) target = $region17
    $region16: #{tpu_custom_call.1} parent=1 // pred_region
      %vm28 = vcmask 58368
      %29 = vst.msk [vmem:[#allocation2] sm:$0x3] %vm28, 0.0
      %30 = vst.msk [vmem:[#allocation3] sm:$0x3] %vm28, 0.0
    $region17: #{tpu_custom_call.1} parent=1 // pred_fallthru
      _
    %v31 = vld [vmem:[#allocation4] sm:$0x3]
    %v32 = vcvt.s32.f32 %v31
    %v33 = vld [vmem:[%s1] sm:$0x3]
    %v34 = vxor.u32 %v33, 2147483648
    %v35 = vmul.f32 %v34, 1.442695
    %v36 = vpow.pop %v35
    %v37 = vadd.f32 %v36, 1.0
    %v38 = vrcp.pop %v37
    %v39 = vmul.f32 1.0, %v38
    %v40 = vld [vmem:[#allocation2] sm:$0x3]
    %v41 = vmul.f32 %v32, %v39
    %v42 = vadd.f32 %v41, 0.0
    %v43 = vadd.f32 %v40, %v42
    %vm44 = vcmask 58368
    %45 = vst.msk [vmem:[#allocation2] sm:$0x3] %vm44, %v43
    %v46 = vld [vmem:[#allocation3] sm:$0x3]
    %v47 = vadd.f32 %v32, %v39
    %v48 = vadd.f32 %v47, 0.0
    %v49 = vadd.f32 %v46, %v48
    %50 = vst.msk [vmem:[#allocation3] sm:$0x3] %vm44, %v49
    // Predicated region
    $region18: #{tpu_custom_call.1} parent=1 // pred_check
      %p51 = pneg %p24
    $region19: #{tpu_custom_call.1} parent=1 // pred_check_branch
      %53 = sbr.rel (%p51) target = $region21
    $region20: #{tpu_custom_call.1} parent=1 // pred_region
      %v54 = vld [vmem:[#allocation2] sm:$0x3]
      %v55 = vsel %vm44, %v54, 0.0
      %v56 = vrot.slane %v55, 4
      %v57 = vadd.f32 %v55, %v56
      %v58 = vrot.slane %v57, 2
      %v59 = vadd.f32 %v57, %v58
      %v60 = vrot.slane %v59, 1
      %v61 = vadd.f32 %v59, %v60
      %v62 = vld [vmem:[#allocation3] sm:$0x3]
      %v63 = vsel %vm44, %v62, 0.0
      %v64 = vrot.slane %v63, 4
      %v65 = vadd.f32 %v63, %v64
      %v66 = vrot.slane %v65, 2
      %v67 = vadd.f32 %v65, %v66
      %v68 = vrot.slane %v67, 1
      %v69 = vadd.f32 %v67, %v68
      %v70 = vmul.f32 %v61, 6.0
      %v71 = vadd.f32 %v70, %v69
      %v72 = vadd.f32 %v71, 1e-16
      %v73 = vmul.f32 %v61, 5.0
      %v74 = vrcp.pop %v72
      %v75 = vmul.f32 %v73, %v74
      %v76 = vsub.f32 1.0, %v75
      %vm77 = vcmask 57344
      %78 = vst.msk [vmem:[#allocation7] sm:$0x1] %vm77, %v76
    $region21: #{tpu_custom_call.1} parent=1 // pred_fallthru
      _
    // Predicated region
    $region22: #{tpu_custom_call.1} parent=1 // pred_check
      _
    $region23: #{tpu_custom_call.1} parent=1 // pred_check_branch
      %80 = sbr.rel (0) target = $region25
    $region24: #{tpu_custom_call.1} parent=1 // pred_region
      %s82 = ssub.s32 16, 16
      %83 = vsyncadd [#allocation6], %s82
      %s85 = sshll.u32 [#allocation7], 4
      %s86 = int_to_ptr.vmem [resolvable:$true] %s85
      %88 = dma.vmem_to_hbm [thread:$0]  %s86, 16, %s2, [#allocation6]
    $region25: #{tpu_custom_call.1} parent=1 // pred_fallthru
      _
    // Predicated region
    $region26: #{tpu_custom_call.1} parent=1 // pred_check
      _
    $region27: #{tpu_custom_call.1} parent=1 // pred_check_branch
      %90 = sbr.rel (0) target = $region29
    $region28: #{tpu_custom_call.1} parent=1 // pred_region
      %91 = dma.done [#allocation6], 16
    $region29: #{tpu_custom_call.1} parent=1 // pred_fallthru
      _
    %92 = vsyncpa [#allocation5], 1
    %93 = vsyncpa [#allocation6], 1

</llo_original>
